<compile_context>
chip_gen: v7x
topology: tpu7x:2x2x1
jax: 0.10.0
libtpu: 0.0.40
codegen_flags: <defaults>
</compile_context>

<pallas_src>
import functools

import jax
import jax.numpy as jnp
from jax.experimental import pallas as pl
from jax.experimental.pallas import tpu as pltpu


# ----------------------------------------------------------------------------
# Kernels
# ----------------------------------------------------------------------------
def eca_kernel(x_ref, cmT_ref, w1T_ref, w2T_ref, o_ref):
    """Single-pass ECA + nested-SE attention for one (bt, C, HW) batch block.

    x_ref  : (bt, C, HW) VMEM — channels on sublanes, spatial on lanes
    cmT_ref: (C, C)      VMEM — transposed banded channel-conv matrix
    w1T_ref: (C, C//r)   VMEM — SE fc1 weight, transposed
    w2T_ref: (C//r, C)   VMEM — SE fc2 weight, transposed
    o_ref  : (bt, C, HW) VMEM
    """
    hw = x_ref.shape[2]
    inv_hw = 1.0 / float(hw)

    # Global average pool over the spatial (lane) axis for the whole block,
    # f32 accumulation.
    p = jnp.sum(x_ref[...].astype(jnp.float32), axis=-1) * inv_hw          # (bt, C)

    # 1D conv across channels == one small batched matmul (MXU is idle anyway).
    q = jnp.dot(p, cmT_ref[...], preferred_element_type=jnp.float32)       # (bt, C)

    # Nested SE block (its input is 1x1 spatially -> its avg-pool is identity).
    h1 = jnp.maximum(
        jnp.dot(q, w1T_ref[...], preferred_element_type=jnp.float32), 0.0)  # (bt, C//r)
    h2 = jnp.dot(h1, w2T_ref[...], preferred_element_type=jnp.float32)      # (bt, C)
    attn = jax.nn.sigmoid(jax.nn.sigmoid(h2) * q)                           # (bt, C)

    # Apply channel attention; x is re-indexed at point of use, store is
    # lane-dense along HW.
    a = attn[:, :, None].astype(x_ref.dtype)                                # (bt, C, 1)
    o_ref[...] = (x_ref[...] * a).astype(o_ref.dtype)


def eca_pool_attn_kernel(x_ref, cmT_ref, w1T_ref, w2T_ref, attn_ref, acc_ref,
                         *, hw_total):
    """Two-pass fallback, pass 1: accumulate the pool over an HW grid axis and,
    on the last HW step, compute the per-channel attention vector."""
    hw_i = pl.program_id(1)
    n_hw = pl.num_programs(1)
    t_hw = x_ref.shape[2]

    @pl.when(hw_i == 0)
    def _():
        acc_ref[...] = jnp.zeros_like(acc_ref)

    x = x_ref[...].astype(jnp.float32)                                      # (bt, C, t_hw)
    if hw_total % t_hw != 0:
        # Ragged tail: mask out-of-range lanes so they do not pollute the sum.
        lane = jax.lax.broadcasted_iota(jnp.int32, x.shape, 2) + hw_i * t_hw
        x = jnp.where(lane < hw_total, x, 0.0)
    acc_ref[...] += jnp.sum(x, axis=-1)                                     # (bt, C)

    @pl.when(hw_i == n_hw - 1)
    def _():
        p = acc_ref[...] * (1.0 / float(hw_total))                          # (bt, C)
        q = jnp.dot(p, cmT_ref[...], preferred_element_type=jnp.float32)
        h1 = jnp.maximum(
            jnp.dot(q, w1T_ref[...], preferred_element_type=jnp.float32), 0.0)
        h2 = jnp.dot(h1, w2T_ref[...], preferred_element_type=jnp.float32)
        attn = jax.nn.sigmoid(jax.nn.sigmoid(h2) * q)                       # (bt, C)
        attn_ref[...] = attn[:, :, None]                                    # (bt, C, 1)


def eca_apply_kernel(x_ref, attn_ref, o_ref):
    """Two-pass fallback, pass 2: apply the attention vector while re-streaming x."""
    a = attn_ref[...].astype(x_ref.dtype)                                   # (bt, C, 1)
    o_ref[...] = (x_ref[...] * a).astype(o_ref.dtype)


# ----------------------------------------------------------------------------
# Sizing helpers
# ----------------------------------------------------------------------------
def _vmem_budget():
    """Generation-aware (ceiling, streaming-block target) in bytes."""
    try:
        cap = int(pltpu.get_tpu_info().vmem_capacity_bytes)
    except Exception:
        cap = 128 << 20
    if cap <= (64 << 20):           # v7x-class core: 64 MiB physical VMEM
        return 48 << 20, 4 << 20    # leave ~16 MiB headroom for compiler scratch
    return 96 << 20, 12 << 20       # v5e / v6e: 128 MiB physical VMEM


def _vmem_limit(need_bytes, ceiling):
    return int(min(max(need_bytes + (2 << 20), 16 << 20), ceiling))


def _pick_batch_block(B, per_img_bytes, target_bytes, max_bt=8, min_steps=8):
    """Batch images per grid step: big enough to amortize the ~0.35 us per-step
    overhead, small enough to give >= min_steps grid steps (>= 4 per TensorCore
    under megacore) so the pipeline can hide the in-kernel VMEM passes."""
    bt = max(1, min(B, max_bt, target_bytes // max(per_img_bytes, 1)))
    want_steps = min(B, min_steps)
    while bt > 1 and pl.cdiv(B, bt) < want_steps:
        bt -= 1
    return bt


def _pick_hw_block(HW, bt, C, itemsize, target_bytes):
    """Lane-dense HW tile (multiple of 128) for the two-pass path."""
    if HW <= 128:
        return HW
    max_lanes = max(1, target_bytes // max(bt * C * itemsize, 1))
    if max_lanes >= HW:
        return HW
    return max(128, (max_lanes // 128) * 128)


# ----------------------------------------------------------------------------
# pallas_call wrappers
# ----------------------------------------------------------------------------
def _eca_single_pass(x, cmT, w1T, w2T, B, C, HW, dtype, vmem_ceiling,
                     block_target, alias_input):
    itemsize = dtype.itemsize
    Cr = w1T.shape[1]
    per_img = C * HW * itemsize
    bt = _pick_batch_block(B, per_img, block_target)
    weight_bytes = 4 * (C * C + 2 * C * Cr)
    # in + out blocks, double-buffered, plus double-buffered resident weights.
    need = 4 * bt * per_img + 2 * weight_bytes

    return pl.pallas_call(
        eca_kernel,
        out_shape=jax.ShapeDtypeStruct((B, C, HW), dtype),
        grid_spec=pltpu.PrefetchScalarGridSpec(
            num_scalar_prefetch=0,
            grid=(pl.cdiv(B, bt),),
            in_specs=[
                pl.BlockSpec((bt, C, HW), lambda i: (i, 0, 0)),
                pl.BlockSpec((C, C), lambda i: (0, 0)),   # constant index -> DMA'd once
                pl.BlockSpec((C, Cr), lambda i: (0, 0)),
                pl.BlockSpec((Cr, C), lambda i: (0, 0)),
            ],
            out_specs=pl.BlockSpec((bt, C, HW), lambda i: (i, 0, 0)),
        ),
        compiler_params=pltpu.CompilerParams(
            dimension_semantics=("parallel",),
            vmem_limit_bytes=_vmem_limit(need, vmem_ceiling),
        ),
        input_output_aliases={0: 0} if alias_input else {},
    )(x, cmT, w1T, w2T)


def _eca_two_pass(x, cmT, w1T, w2T, B, C, HW, dtype, vmem_ceiling,
                  block_target, hw_block, alias_input):
    """HW-tiled fallback for feature maps whose (C, HW) slab exceeds the
    VMEM budget (hit first on v7x).  Costs ~1.5x HBM traffic, only when needed."""
    itemsize = dtype.itemsize
    Cr = w1T.shape[1]
    bt = 1  # this path exists precisely because a single image slab is large
    t_hw = hw_block if hw_block is not None else _pick_hw_block(
        HW, bt, C, itemsize, block_target)
    n_b = pl.cdiv(B, bt)
    n_hw = pl.cdiv(HW, t_hw)
    blk_bytes = bt * C * t_hw * itemsize
    weight_bytes = 4 * (C * C + 2 * C * Cr)

    # ---- pass 1: pooled channel-attention vector ----
    attn = pl.pallas_call(
        functools.partial(eca_pool_attn_kernel, hw_total=HW),
        out_shape=jax.ShapeDtypeStruct((B, C, 1), jnp.float32),
        grid_spec=pltpu.PrefetchScalarGridSpec(
            num_scalar_prefetch=0,
            grid=(n_b, n_hw),
            in_specs=[
                pl.BlockSpec((bt, C, t_hw), lambda i, j: (i, 0, j)),
                pl.BlockSpec((C, C), lambda i, j: (0, 0)),
                pl.BlockSpec((C, Cr), lambda i, j: (0, 0)),
                pl.BlockSpec((Cr, C), lambda i, j: (0, 0)),
            ],
            out_specs=pl.BlockSpec((bt, C, 1), lambda i, j: (i, 0, 0)),
            scratch_shapes=[pltpu.VMEM((bt, C), jnp.float32)],
        ),
        compiler_params=pltpu.CompilerParams(
            dimension_semantics=("parallel", "arbitrary"),
            vmem_limit_bytes=_vmem_limit(2 * blk_bytes + 2 * weight_bytes,
                                         vmem_ceiling),
        ),
    )(x, cmT, w1T, w2T)

    # ---- pass 2: apply, lane-dense over HW ----
    return pl.pallas_call(
        eca_apply_kernel,
        out_shape=jax.ShapeDtypeStruct((B, C, HW), dtype),
        grid_spec=pltpu.PrefetchScalarGridSpec(
            num_scalar_prefetch=0,
            grid=(n_b, n_hw),
            in_specs=[
                pl.BlockSpec((bt, C, t_hw), lambda i, j: (i, 0, j)),
                pl.BlockSpec((bt, C, 1), lambda i, j: (i, 0, 0)),
            ],
            out_specs=pl.BlockSpec((bt, C, t_hw), lambda i, j: (i, 0, j)),
        ),
        compiler_params=pltpu.CompilerParams(
            dimension_semantics=("parallel", "parallel"),
            vmem_limit_bytes=_vmem_limit(4 * blk_bytes, vmem_ceiling),
        ),
        input_output_aliases={0: 0} if alias_input else {},
    )(x, attn)


def eca_pallas(x_nchw, wconv, w1, w2, *, alias_input=False,
               force_two_pass=False, hw_block=None):
    """x_nchw: (B, C, H, W); wconv: (K,) Conv1d weight; w1: (C//r, C); w2: (C, C//r)."""
    B, C, H, W = x_nchw.shape
    HW = H * W
    Cr = w1.shape[0]
    k = wconv.shape[0]
    pad = (k - 1) // 2
    dtype = x_nchw.dtype

    # NCHW -> (B, C, HW): pure reshape, no data movement (unlike a transpose).
    x = x_nchw.reshape(B, C, HW)
    # TODO(synk): when HW % 128 != 0 and C % 128 == 0, a channel-last (B, HW, C)
    # layout would make the apply store fully lane-dense; current layout stays
    # correct (block dims equal full dims) but uses masked stores on such tails.

    # Host-built transposed band matrix: cmT[i, c] = wconv[i - c + pad] inside
    # the band, so q = p @ cmT matches torch Conv1d(1, 1, k, padding=pad, bias=False).
    i_idx = jnp.arange(C, dtype=jnp.int32)[:, None]   # summed (input) channel
    c_idx = jnp.arange(C, dtype=jnp.int32)[None, :]   # output channel
    tap = i_idx - c_idx + pad
    cmT = jnp.where((tap >= 0) & (tap < k),
                    wconv.astype(jnp.float32)[jnp.clip(tap, 0, k - 1)],
                    jnp.float32(0.0))                                    # (C, C)
    # Weights stay f32 (tiny at these C); all accumulation is f32 in-kernel.
    w1T = jnp.asarray(w1, jnp.float32).T     # (C, Cr)
    w2T = jnp.asarray(w2, jnp.float32).T     # (Cr, C)

    vmem_ceiling, block_target = _vmem_budget()
    per_img = C * HW * dtype.itemsize
    weight_bytes = 4 * (C * C + 2 * C * Cr)
    single_pass_fits = (4 * per_img + 2 * weight_bytes) <= vmem_ceiling

    if single_pass_fits and not force_two_pass:
        out = _eca_single_pass(x, cmT, w1T, w2T, B, C, HW, dtype,
                               vmem_ceiling, block_target, alias_input)
    else:
        out = _eca_two_pass(x, cmT, w1T, w2T, B, C, HW, dtype,
                            vmem_ceiling, block_target, hw_block, alias_input)

    return out.reshape(B, C, H, W)


# ----------------------------------------------------------------------------
# Pure-JAX reference (matches the PyTorch forward exactly)
# ----------------------------------------------------------------------------
def eca_reference(x_nchw, wconv, w1, w2):
    B, C, H, W = x_nchw.shape
    k = wconv.shape[0]
    pad = (k - 1) // 2
    p = jnp.mean(x_nchw.astype(jnp.float32), axis=(2, 3))      # (B, C)
    p_pad = jnp.pad(p, ((0, 0), (pad, pad)))
    q = jnp.zeros_like(p)
    for j in range(k):
        q = q + wconv[j] * p_pad[:, j:j + C]
    h1 = jnp.maximum(q @ w1.T, 0.0)
    h2 = h1 @ w2.T
    y1 = jax.nn.sigmoid(h2) * q
    a = jax.nn.sigmoid(y1)                                      # (B, C)
    return x_nchw * a[:, :, None, None].astype(x_nchw.dtype)


if __name__ == "__main__":
    B, C, H, W = 2, 8, 16, 16
    K = 3
    ratio = 4

    key = jax.random.PRNGKey(0)
    kx, kc, k1, k2 = jax.random.split(key, 4)
    x = jax.random.normal(kx, (B, C, H, W), dtype=jnp.float32)
    # Deterministic synthetic parameters (shapes follow the module __init__):
    wconv = jax.random.normal(kc, (K,), dtype=jnp.float32) * 0.5          # Conv1d(1,1,3).weight
    w1 = jax.random.normal(k1, (C // ratio, C), dtype=jnp.float32) * 0.3  # se.fc1 (no bias)
    w2 = jax.random.normal(k2, (C, C // ratio), dtype=jnp.float32) * 0.3  # se.fc2 (no bias)

    ref = eca_reference(x, wconv, w1, w2)

    # Fast path (single-pass, whole (C, HW) slab per image).
    out = jax.block_until_ready(eca_pallas(x, wconv, w1, w2))
    assert out.shape == (B, C, H, W)
    assert jnp.allclose(out, ref, atol=1e-4, rtol=1e-4), "single-pass mismatch"

    # Also exercise the large-feature-map fallback (HW-tiled two-pass schedule).
    out2 = jax.block_until_ready(
        eca_pallas(x, wconv, w1, w2, force_two_pass=True, hw_block=128))
    assert jnp.allclose(out2, ref, atol=1e-4, rtol=1e-4), "two-pass mismatch"

    print("KERNEL_OK")
</pallas_src>

<mosaic_0001>
module attributes {stable_mosaic.version = 11 : i64} {
  func.func @eca_kernel(%arg0: i32, %arg1: memref<1x8x256xf32, #tpu.memory_space<vmem>>, %arg2: memref<8x8xf32, #tpu.memory_space<vmem>>, %arg3: memref<8x2xf32, #tpu.memory_space<vmem>>, %arg4: memref<2x8xf32, #tpu.memory_space<vmem>>, %arg5: memref<1x8x256xf32, #tpu.memory_space<vmem>>) attributes {dimension_semantics = [#tpu.dimension_semantics<parallel>], iteration_bounds = array<i64: 2>, scalar_prefetch = 0 : i64, scratch_operands = 0 : i64, tpu.core_type = #tpu.core_type<tc>, window_params = [{transform_indices = @transform_0, window_bounds = array<i64: 1, 8, 256>}, {pipeline_mode = #tpu.pipeline_mode<synchronous>, transform_indices = @transform_1, window_bounds = array<i64: 8, 8>}, {pipeline_mode = #tpu.pipeline_mode<synchronous>, transform_indices = @transform_2, window_bounds = array<i64: 8, 2>}, {pipeline_mode = #tpu.pipeline_mode<synchronous>, transform_indices = @transform_3, window_bounds = array<i64: 2, 8>}, {transform_indices = @transform_4, window_bounds = array<i64: 1, 8, 256>}]} {
    %c0 = arith.constant 0 : index
    %c0_0 = arith.constant 0 : index
    %c0_1 = arith.constant 0 : index
    %0 = vector.load %arg1[%c0, %c0_0, %c0_1] : memref<1x8x256xf32, #tpu.memory_space<vmem>>, vector<1x8x256xf32>
    %cst = arith.constant dense<0.000000e+00> : vector<1x8xf32>
    %1 = vector.multi_reduction <add>, %0, %cst [2] : vector<1x8x256xf32> to vector<1x8xf32>
    %cst_2 = arith.constant 3.906250e-03 : f32
    %2 = vector.broadcast %cst_2 : f32 to vector<1x8xf32>
    %3 = arith.mulf %1, %2 : vector<1x8xf32>
    %c0_3 = arith.constant 0 : index
    %c0_4 = arith.constant 0 : index
    %4 = vector.load %arg2[%c0_3, %c0_4] : memref<8x8xf32, #tpu.memory_space<vmem>>, vector<8x8xf32>
    %cst_5 = arith.constant dense<0.000000e+00> : vector<1x8xf32>
    %5 = tpu.matmul %3, %4, %cst_5 {dimension_numbers = #tpu.dot_dimension_numbers<[1], [0], [0], [1], [0, 0, 1, 1], [], []>} : vector<1x8xf32>, vector<8x8xf32>, vector<1x8xf32> -> vector<1x8xf32>
    %c0_6 = arith.constant 0 : index
    %c0_7 = arith.constant 0 : index
    %6 = vector.load %arg3[%c0_6, %c0_7] : memref<8x2xf32, #tpu.memory_space<vmem>>, vector<8x2xf32>
    %cst_8 = arith.constant dense<0.000000e+00> : vector<1x2xf32>
    %7 = tpu.matmul %5, %6, %cst_8 {dimension_numbers = #tpu.dot_dimension_numbers<[1], [0], [0], [1], [0, 0, 1, 1], [], []>} : vector<1x8xf32>, vector<8x2xf32>, vector<1x2xf32> -> vector<1x2xf32>
    %cst_9 = arith.constant 0.000000e+00 : f32
    %8 = vector.broadcast %cst_9 : f32 to vector<1x2xf32>
    %9 = arith.maximumf %7, %8 : vector<1x2xf32>
    %c0_10 = arith.constant 0 : index
    %c0_11 = arith.constant 0 : index
    %10 = vector.load %arg4[%c0_10, %c0_11] : memref<2x8xf32, #tpu.memory_space<vmem>>, vector<2x8xf32>
    %cst_12 = arith.constant dense<0.000000e+00> : vector<1x8xf32>
    %11 = tpu.matmul %9, %10, %cst_12 {dimension_numbers = #tpu.dot_dimension_numbers<[1], [0], [0], [1], [0, 0, 1, 1], [], []>} : vector<1x2xf32>, vector<2x8xf32>, vector<1x8xf32> -> vector<1x8xf32>
    %12 = arith.negf %11 : vector<1x8xf32>
    %13 = math.exp %12 : vector<1x8xf32>
    %cst_13 = arith.constant 1.000000e+00 : f32
    %14 = vector.broadcast %cst_13 : f32 to vector<1x8xf32>
    %15 = arith.addf %14, %13 : vector<1x8xf32>
    %16 = arith.divf %14, %15 : vector<1x8xf32>
    %17 = arith.mulf %16, %5 : vector<1x8xf32>
    %18 = arith.negf %17 : vector<1x8xf32>
    %19 = math.exp %18 : vector<1x8xf32>
    %cst_14 = arith.constant 1.000000e+00 : f32
    %20 = vector.broadcast %cst_14 : f32 to vector<1x8xf32>
    %21 = arith.addf %20, %19 : vector<1x8xf32>
    %22 = arith.divf %20, %21 : vector<1x8xf32>
    %23 = vector.shape_cast %22 : vector<1x8xf32> to vector<1x8x1xf32>
    %c0_15 = arith.constant 0 : index
    %c0_16 = arith.constant 0 : index
    %c0_17 = arith.constant 0 : index
    %24 = vector.load %arg1[%c0_15, %c0_16, %c0_17] : memref<1x8x256xf32, #tpu.memory_space<vmem>>, vector<1x8x256xf32>
    %25 = vector.broadcast %23 : vector<1x8x1xf32> to vector<1x8x256xf32>
    %26 = arith.mulf %24, %25 : vector<1x8x256xf32>
    %c0_18 = arith.constant 0 : index
    %c0_19 = arith.constant 0 : index
    %c0_20 = arith.constant 0 : index
    %27 = vector.load %arg5[%c0_18, %c0_19, %c0_20] : memref<1x8x256xf32, #tpu.memory_space<vmem>>, vector<1x8x256xf32>
    tpu.vector_store %arg5[%c0_18, %c0_19, %c0_20], %26 {strides = array<i32>} : memref<1x8x256xf32, #tpu.memory_space<vmem>>, vector<1x8x256xf32>,
    return
  }
  func.func @transform_0(%arg0: i32) -> (i32, i32, i32) {
    %c0_i32 = arith.constant 0 : i32
    %c0_i32_0 = arith.constant 0 : i32
    %c0_i32_1 = arith.constant 0 : i32
    return %arg0, %c0_i32, %c0_i32_0 : i32, i32, i32
  }
  func.func @transform_1(%arg0: i32) -> (i32, i32) {
    %c0_i32 = arith.constant 0 : i32
    %c0_i32_0 = arith.constant 0 : i32
    %c0_i32_1 = arith.constant 0 : i32
    return %c0_i32, %c0_i32_0 : i32, i32
  }
  func.func @transform_2(%arg0: i32) -> (i32, i32) {
    %c0_i32 = arith.constant 0 : i32
    %c0_i32_0 = arith.constant 0 : i32
    %c0_i32_1 = arith.constant 0 : i32
    return %c0_i32, %c0_i32_0 : i32, i32
  }
  func.func @transform_3(%arg0: i32) -> (i32, i32) {
    %c0_i32 = arith.constant 0 : i32
    %c0_i32_0 = arith.constant 0 : i32
    %c0_i32_1 = arith.constant 0 : i32
    return %c0_i32, %c0_i32_0 : i32, i32
  }
  func.func @transform_4(%arg0: i32) -> (i32, i32, i32) {
    %c0_i32 = arith.constant 0 : i32
    %c0_i32_0 = arith.constant 0 : i32
    %c0_i32_1 = arith.constant 0 : i32
    return %arg0, %c0_i32, %c0_i32_0 : i32, i32, i32
  }
}

</mosaic_0001>

<llo_original>
// kernel: tpu_custom_call.1
$region0: #{tpu_custom_call.1}
  #allocation0 [shape = 'u32[]', space=smem, size = 0x4, offset = 0x4, fixed_abs, tag = 'smem constant byte address 0x4 - core index']
  #allocation1 [shape = 'u32[144,128]{1,0:T(1,128)}', space=vmem, size = 0x12000, scoped, tag = 'internal scratch']
  %s0 = inlined_call_operand.hbm [shape: f32[2,8,256], index: 0, kind: input, shape index: {}]
  %s1 = inlined_call_operand.vmem [shape: f32[8,8], index: 1, kind: input, shape index: {}]
  %s2 = inlined_call_operand.vmem [shape: f32[8,2], index: 2, kind: input, shape index: {}]
  %s3 = inlined_call_operand.vmem [shape: f32[2,8], index: 3, kind: input, shape index: {}]
  %s4 = inlined_call_operand.hbm [shape: f32[2,8,256], index: 4, kind: output, shape index: {}]
  %s5 = sld [smem:[#allocation0]]
  $region53: #{tpu_custom_call.1} parent=0
    _
  %s7 = ssub.s32 1, %s5
  %s8 = scalar_select 0, %s7, %s5
  $region1: #{tpu_custom_call.1} parent=0
    #allocation2 [shape = 'u8[16384]{0}', space=vmem, size = 0x4000, scoped, tag = 'input window, operand 0']
    #allocation3 [shape = 's32[2]{0}', space=sflag, size = 0x8, scoped, tag = 'scoped memory for tpu_custom_call.1']
    #allocation4 [shape = 's32[2]{0}', space=sflag, size = 0x8, scoped, tag = 'scoped memory for tpu_custom_call.1']
    #allocation5 [shape = 'u8[16384]{0}', space=vmem, size = 0x4000, scoped, tag = 'output window, operand 0']
    %9 = vsyncpa [#allocation3], 0
    %s10 = scalar_lea.sflag [#allocation3], 1
    %11 = vsyncpa %s10, 0
    %12 = vsyncpa [#allocation4], 0
    %s13 = scalar_lea.sflag [#allocation4], 1
    %14 = vsyncpa %s13, 0
    loop: start=0, step=1, limit=4
    $region2: #{tpu_custom_call.1} parent=1 // loop_pre_header
      _
    $region3: #{tpu_custom_call.1} parent=1 // loop_header
      %s16 = sphi 0, %s20
      %p17 = scmp.ge.s32.totalorder %s16, 4
      %s26 = sphi 0, %s28
      %s29 = sphi 0, %s26
      %s30 = sphi 0, %s29
      %s46 = sphi 0, %s30
      %s50 = sphi 0, %s50
      %s52 = sphi 0, %s50
      %s53 = sphi 0, %s52
      %s67 = sphi 0, %s53
      %s71 = sphi 0, %s71
      %s73 = sphi 0, %s71
      %s74 = sphi 0, %s73
      %s88 = sphi 0, %s74
      %s92 = sphi 0, %s92
      %s94 = sphi 0, %s92
      %s95 = sphi 0, %s94
      %s109 = sphi 0, %s95
      %s115 = sphi 0, %s117
      %s118 = sphi 0, %s115
      %s119 = sphi 0, %s118
      %s135 = sphi 0, %s119
    $region4: #{tpu_custom_call.1} parent=1 // loop_header_branch
      %19 = sbr.rel (%p17) target = $region8
    $region5: #{tpu_custom_call.1} parent=1 // loop_body
      %s21 = ssub.s32 %s16, 1
      %s22 = ssub.s32 %s16, 2
      %s23 = sadd.s32 %s16, 1
      %s24 = ssub.s32 %s16, %s23
      %p25 = scmp.eq.s32.totalorder %s24, 0
      %s27 = sadd.s32 %s26, 1
      %s28 = scalar_select %p25, %s26, %s27
      %p31 = pneg %p25
      %p32 = scmp.eq.s32.totalorder %s16, 1
      %p33 = por %p31, %p32
      %p34 = scmp.ne.s32.totalorder %s26, %s29
      %p35 = scmp.eq.s32.totalorder %s16, 0
      %p36 = por %p34, %p35
      %p37 = scmp.ne.s32.totalorder %s26, %s29
      %p38 = scmp.eq.s32.totalorder %s21, 1
      %p39 = por %p37, %p38
      %p40 = scmp.ne.s32.totalorder %s29, %s30
      %p41 = scmp.eq.s32.totalorder %s21, 0
      %p42 = por %p40, %p41
      %p43 = scmp.ne.s32.totalorder %s29, %s30
      %p44 = scmp.eq.s32.totalorder %s22, 1
      %p45 = por %p43, %p44
      %p47 = scmp.ne.s32.totalorder %s30, %s46
      %p48 = scmp.eq.s32.totalorder %s22, 0
      %p49 = por %p47, %p48
      %s51 = sadd.s32 %s50, 1
      %p54 = scmp.eq.s32.totalorder %s16, 1
      %p55 = scmp.ne.s32.totalorder %s50, %s52
      %p56 = scmp.eq.s32.totalorder %s16, 0
      %p57 = por %p55, %p56
      %p58 = scmp.ne.s32.totalorder %s50, %s52
      %p59 = scmp.eq.s32.totalorder %s21, 1
      %p60 = por %p58, %p59
      %p61 = scmp.ne.s32.totalorder %s52, %s53
      %p62 = scmp.eq.s32.totalorder %s21, 0
      %p63 = por %p61, %p62
      %p64 = scmp.ne.s32.totalorder %s52, %s53
      %p65 = scmp.eq.s32.totalorder %s22, 1
      %p66 = por %p64, %p65
      %p68 = scmp.ne.s32.totalorder %s53, %s67
      %p69 = scmp.eq.s32.totalorder %s22, 0
      %p70 = por %p68, %p69
      %s72 = sadd.s32 %s71, 1
      %p75 = scmp.eq.s32.totalorder %s16, 1
      %p76 = scmp.ne.s32.totalorder %s71, %s73
      %p77 = scmp.eq.s32.totalorder %s16, 0
      %p78 = por %p76, %p77
      %p79 = scmp.ne.s32.totalorder %s71, %s73
      %p80 = scmp.eq.s32.totalorder %s21, 1
      %p81 = por %p79, %p80
      %p82 = scmp.ne.s32.totalorder %s73, %s74
      %p83 = scmp.eq.s32.totalorder %s21, 0
      %p84 = por %p82, %p83
      %p85 = scmp.ne.s32.totalorder %s73, %s74
      %p86 = scmp.eq.s32.totalorder %s22, 1
      %p87 = por %p85, %p86
      %p89 = scmp.ne.s32.totalorder %s74, %s88
      %p90 = scmp.eq.s32.totalorder %s22, 0
      %p91 = por %p89, %p90
      %s93 = sadd.s32 %s92, 1
      %p96 = scmp.eq.s32.totalorder %s16, 1
      %p97 = scmp.ne.s32.totalorder %s92, %s94
      %p98 = scmp.eq.s32.totalorder %s16, 0
      %p99 = por %p97, %p98
      %p100 = scmp.ne.s32.totalorder %s92, %s94
      %p101 = scmp.eq.s32.totalorder %s21, 1
      %p102 = por %p100, %p101
      %p103 = scmp.ne.s32.totalorder %s94, %s95
      %p104 = scmp.eq.s32.totalorder %s21, 0
      %p105 = por %p103, %p104
      %p106 = scmp.ne.s32.totalorder %s94, %s95
      %p107 = scmp.eq.s32.totalorder %s22, 1
      %p108 = por %p106, %p107
      %p110 = scmp.ne.s32.totalorder %s95, %s109
      %p111 = scmp.eq.s32.totalorder %s22, 0
      %p112 = por %p110, %p111
      %s113 = ssub.s32 %s16, %s23
      %p114 = scmp.eq.s32.totalorder %s113, 0
      %s116 = sadd.s32 %s115, 1
      %s117 = scalar_select %p114, %s115, %s116
      %p120 = pneg %p114
      %p121 = scmp.eq.s32.totalorder %s16, 1
      %p122 = por %p120, %p121
      %p123 = scmp.ne.s32.totalorder %s115, %s118
      %p124 = scmp.eq.s32.totalorder %s16, 0
      %p125 = por %p123, %p124
      %p126 = scmp.ne.s32.totalorder %s115, %s118
      %p127 = scmp.eq.s32.totalorder %s21, 1
      %p128 = por %p126, %p127
      %p129 = scmp.ne.s32.totalorder %s118, %s119
      %p130 = scmp.eq.s32.totalorder %s21, 0
      %p131 = por %p129, %p130
      %p132 = scmp.ne.s32.totalorder %s118, %s119
      %p133 = scmp.eq.s32.totalorder %s22, 1
      %p134 = por %p132, %p133
      %p136 = scmp.ne.s32.totalorder %s119, %s135
      %p137 = scmp.eq.s32.totalorder %s22, 0
      %p138 = por %p136, %p137
      %p139 = scmp.le.s32.totalorder 1, %s16
      %p140 = scmp.lt.s32.totalorder %s16, 3
      %p141 = pnand %p139, %p140
      %p142 = pneg %p141
      // Predicated region
      $region9: #{tpu_custom_call.1} parent=5 // pred_check
        _
      $region10: #{tpu_custom_call.1} parent=5 // pred_check_branch
        %144 = sbr.rel (%p141) target = $region12
      $region11: #{tpu_custom_call.1} parent=5 // pred_region
        %s145 = ssub.s32 %s16, 1
        // Predicated region
        $region13: #{tpu_custom_call.1} parent=11 // pred_check
          %p146 = pneg %p63
        $region14: #{tpu_custom_call.1} parent=11 // pred_check_branch
          %148 = sbr.rel (%p146) target = $region16
        $region15: #{tpu_custom_call.1} parent=11 // pred_region
          _
        $region16: #{tpu_custom_call.1} parent=11 // pred_fallthru
          _
        // Predicated region
        $region17: #{tpu_custom_call.1} parent=11 // pred_check
          %p149 = pneg %p84
        $region18: #{tpu_custom_call.1} parent=11 // pred_check_branch
          %151 = sbr.rel (%p149) target = $region20
        $region19: #{tpu_custom_call.1} parent=11 // pred_region
          _
        $region20: #{tpu_custom_call.1} parent=11 // pred_fallthru
          _
        // Predicated region
        $region21: #{tpu_custom_call.1} parent=11 // pred_check
          %p152 = pneg %p105
        $region22: #{tpu_custom_call.1} parent=11 // pred_check_branch
          %154 = sbr.rel (%p152) target = $region24
        $region23: #{tpu_custom_call.1} parent=11 // pred_region
          _
        $region24: #{tpu_custom_call.1} parent=11 // pred_fallthru
          _
      $region12: #{tpu_custom_call.1} parent=5 // pred_fallthru
        _
      %p155 = scmp.lt.s32.totalorder %s16, 2
      // Predicated region
      $region25: #{tpu_custom_call.1} parent=5 // pred_check
        %p156 = pneg %p155
      $region26: #{tpu_custom_call.1} parent=5 // pred_check_branch
        %158 = sbr.rel (%p156) target = $region28
      $region27: #{tpu_custom_call.1} parent=5 // pred_region
        // Predicated region
        $region29: #{tpu_custom_call.1} parent=27 // pred_check
          %p159 = pneg %p36
        $region30: #{tpu_custom_call.1} parent=27 // pred_check_branch
          %161 = sbr.rel (%p159) target = $region32
        $region31: #{tpu_custom_call.1} parent=27 // pred_region
          %s162 = sand.u32 %s26, 1
          %s163 = scalar_lea.sflag [#allocation3], %s162
          %s164 = sand.u32 %s26, 1
          %s165 = smul.addr %s164, 16
          %s166 = scalar_lea.vmem [#allocation2], %s165
          %s168 = ssub.s32 256, 256
          %169 = vsyncadd %s163, %s168
          %s170 = smul.addr %s16, 2
          %s171 = smul.addr %s170, 128
          %s172 = scalar_lea.hbm %s0, %s171
          %s174 = sshll.u32 %s166, 4
          %s175 = int_to_ptr.vmem [resolvable:$true] %s174
          %177 = dma.hbm_to_vmem [thread:$0]  %s172, 256, %s175, %s163
        $region32: #{tpu_custom_call.1} parent=27 // pred_fallthru
          _
      $region28: #{tpu_custom_call.1} parent=5 // pred_fallthru
        _
      %p178 = scmp.le.s32.totalorder 1, %s16
      %p179 = scmp.lt.s32.totalorder %s16, 3
      %p180 = pnand %p178, %p179
      %p181 = pneg %p180
      // Predicated region
      $region33: #{tpu_custom_call.1} parent=5 // pred_check
        _
      $region34: #{tpu_custom_call.1} parent=5 // pred_check_branch
        %183 = sbr.rel (%p180) target = $region36
      $region35: #{tpu_custom_call.1} parent=5 // pred_region
        %s184 = ssub.s32 %s16, 1
        %s185 = sand.u32 %s29, 1
        %s186 = scalar_lea.sflag [#allocation3], %s185
        %s187 = sand.u32 %s29, 1
        %s188 = smul.addr %s187, 16
        %s189 = scalar_lea.vmem [#allocation2], %s188
        // Predicated region
        $region37: #{tpu_custom_call.1} parent=35 // pred_check
          %p190 = pneg %p42
        $region38: #{tpu_custom_call.1} parent=35 // pred_check_branch
          %192 = sbr.rel (%p190) target = $region40
        $region39: #{tpu_custom_call.1} parent=35 // pred_region
          %193 = dma.done %s186, 256
        $region40: #{tpu_custom_call.1} parent=35 // pred_fallthru
          _
        %s194 = sand.u32 %s29, 1
        %s195 = scalar_lea.sflag [#allocation3], %s194
        %s196 = sand.u32 %s29, 1
        %s197 = smul.addr %s196, 16
        %s198 = scalar_lea.vmem [#allocation2], %s197
        %p199 = pneg %p42
        %p200 = pneg %p39
        %p201 = pneg %p63
        %p202 = pneg %p60
        %p203 = pneg %p84
        %p204 = pneg %p81
        %p205 = pneg %p105
        %p206 = pneg %p102
        %p207 = pneg %p131
        %p208 = pneg %p128
        %s209 = sand.u32 %s118, 1
        %s210 = scalar_lea.sflag [#allocation4], %s209
        %s211 = sand.u32 %s118, 1
        %s212 = smul.addr %s211, 16
        %s213 = scalar_lea.vmem [#allocation5], %s212
        %v214 = vld [vmem:[%s189] sm:$0xff]
        %v215 = vld [vmem:[%s189 + $0x8] sm:$0xff]
        %v216 = vadd.f32 %v214, %v215
        %217 = vadd.xlane.f32.xlu0 %v216
        %v218 = vpop.xlane.xlu0 %217
        %v219 = vmul.f32 %v218, 0.00390625
        %v220 = vld [vmem:[%s1] sm:$0xff]
        %v222 = vlaneseq
        %v223 = vand.u32 %v222, 127
        %v224 = vlaneseq
        %v225 = vshrl.u32 %v224, 7
        %v226 = vsub.s32 %v223, %v225
        %v227 = vrot.slane %v219, %v226
        %vm228 = vcmask 64512
        %v229 = vsel %vm228, %v227, 0
        %231 = vmatprep.subr.mxu0 0.0
        %232 = vmatpush1.msra.mxu0 %v220
        %233 = vmatprep.subr.mxu0 0.0
        %234 = vmatpush1.msra.mxu0 0.0
        %235 = vmatprep.subr.mxu0 0.0
        %236 = vmatpush1.msra.mxu0 0.0
        %237 = vmatprep.subr.mxu0 0.0
        %238 = vmatpush1.msra.mxu0 0.0
        %239 = vmatprep.subr.mxu0 0.0
        %240 = vmatpush1.msra.mxu0 0.0
        %241 = vmatprep.subr.mxu0 0.0
        %242 = vmatpush1.msra.mxu0 0.0
        %243 = vmatprep.subr.mxu0 0.0
        %244 = vmatpush1.msra.mxu0 0.0
        %245 = vmatprep.subr.mxu0 0.0
        %246 = vmatpush1.msra.mxu0 0.0
        %247 = vmatprep.subr.mxu0 0.0
        %248 = vmatpush1.msra.mxu0 0.0
        %249 = vmatprep.subr.mxu0 0.0
        %250 = vmatpush1.msra.mxu0 0.0
        %251 = vmatprep.subr.mxu0 0.0
        %252 = vmatpush1.msra.mxu0 0.0
        %253 = vmatprep.subr.mxu0 0.0
        %254 = vmatpush1.msra.mxu0 0.0
        %255 = vmatprep.subr.mxu0 0.0
        %256 = vmatpush1.msra.mxu0 0.0
        %257 = vmatprep.subr.mxu0 0.0
        %258 = vmatpush1.msra.mxu0 0.0
        %259 = vmatprep.subr.mxu0 0.0
        %260 = vmatpush1.msra.mxu0 0.0
        %261 = vmatprep.subr.mxu0 0.0
        %262 = vmatpush1.msra.mxu0 0.0
        %263 = vmatprep.subr.mxu0 0.0
        %264 = vmatpush1.msra.mxu0 0.0
        %265 = vmatprep.subr.mxu0 0.0
        %266 = vmatpush1.msra.mxu0 0.0
        %267 = vmatprep.subr.mxu0 0.0
        %268 = vmatpush1.msra.mxu0 0.0
        %269 = vmatprep.subr.mxu0 0.0
        %270 = vmatpush1.msra.mxu0 0.0
        %271 = vmatprep.subr.mxu0 0.0
        %272 = vmatpush1.msra.mxu0 0.0
        %273 = vmatprep.subr.mxu0 0.0
        %274 = vmatpush1.msra.mxu0 0.0
        %275 = vmatprep.subr.mxu0 0.0
        %276 = vmatpush1.msra.mxu0 0.0
        %277 = vmatprep.subr.mxu0 0.0
        %278 = vmatpush1.msra.mxu0 0.0
        %279 = vmatprep.subr.mxu0 0.0
        %280 = vmatpush1.msra.mxu0 0.0
        %281 = vmatprep.subr.mxu0 0.0
        %282 = vmatpush1.msra.mxu0 0.0
        %283 = vmatprep.subr.mxu0 0.0
        %284 = vmatpush1.msra.mxu0 0.0
        %285 = vmatprep.subr.mxu0 0.0
        %286 = vmatpush1.msra.mxu0 0.0
        %287 = vmatprep.subr.mxu0 0.0
        %288 = vmatpush1.msra.mxu0 0.0
        %289 = vmatprep.subr.mxu0 0.0
        %290 = vmatpush1.msra.mxu0 0.0
        %291 = vmatprep.subr.mxu0 0.0
        %292 = vmatpush1.msra.mxu0 0.0
        %293 = vmatprep.subr.mxu0 0.0
        %294 = vmatpush1.msra.mxu0 0.0
        %295 = vmatprep.mubr.f32.mxu0 0.0
        %296 = vmatmul.mubr.f32.gmra.mrb[0].mxu0 %v229
        %v297 = vpop.f32.mrb[0].mxu0
        %v298 = vadd.f32 0.0, %v297
        %v299 = vpop.f32.mrb[0].mxu0
        %300 = vdwg.mxu0
        %v301 = vld [vmem:[%s2] sm:$0xff]
        %v303 = vsel %vm228, %v298, 0
        %305 = vmatprep.subr.mxu0 0.0
        %306 = vmatpush1.msra.mxu0 %v301
        %307 = vmatprep.subr.mxu0 0.0
        %308 = vmatpush1.msra.mxu0 0.0
        %309 = vmatprep.subr.mxu0 0.0
        %310 = vmatpush1.msra.mxu0 0.0
        %311 = vmatprep.subr.mxu0 0.0
        %312 = vmatpush1.msra.mxu0 0.0
        %313 = vmatprep.subr.mxu0 0.0
        %314 = vmatpush1.msra.mxu0 0.0
        %315 = vmatprep.subr.mxu0 0.0
        %316 = vmatpush1.msra.mxu0 0.0
        %317 = vmatprep.subr.mxu0 0.0
        %318 = vmatpush1.msra.mxu0 0.0
        %319 = vmatprep.subr.mxu0 0.0
        %320 = vmatpush1.msra.mxu0 0.0
        %321 = vmatprep.subr.mxu0 0.0
        %322 = vmatpush1.msra.mxu0 0.0
        %323 = vmatprep.subr.mxu0 0.0
        %324 = vmatpush1.msra.mxu0 0.0
        %325 = vmatprep.subr.mxu0 0.0
        %326 = vmatpush1.msra.mxu0 0.0
        %327 = vmatprep.subr.mxu0 0.0
        %328 = vmatpush1.msra.mxu0 0.0
        %329 = vmatprep.subr.mxu0 0.0
        %330 = vmatpush1.msra.mxu0 0.0
        %331 = vmatprep.subr.mxu0 0.0
        %332 = vmatpush1.msra.mxu0 0.0
        %333 = vmatprep.subr.mxu0 0.0
        %334 = vmatpush1.msra.mxu0 0.0
        %335 = vmatprep.subr.mxu0 0.0
        %336 = vmatpush1.msra.mxu0 0.0
        %337 = vmatprep.subr.mxu0 0.0
        %338 = vmatpush1.msra.mxu0 0.0
        %339 = vmatprep.subr.mxu0 0.0
        %340 = vmatpush1.msra.mxu0 0.0
        %341 = vmatprep.subr.mxu0 0.0
        %342 = vmatpush1.msra.mxu0 0.0
        %343 = vmatprep.subr.mxu0 0.0
        %344 = vmatpush1.msra.mxu0 0.0
        %345 = vmatprep.subr.mxu0 0.0
        %346 = vmatpush1.msra.mxu0 0.0
        %347 = vmatprep.subr.mxu0 0.0
        %348 = vmatpush1.msra.mxu0 0.0
        %349 = vmatprep.subr.mxu0 0.0
        %350 = vmatpush1.msra.mxu0 0.0
        %351 = vmatprep.subr.mxu0 0.0
        %352 = vmatpush1.msra.mxu0 0.0
        %353 = vmatprep.subr.mxu0 0.0
        %354 = vmatpush1.msra.mxu0 0.0
        %355 = vmatprep.subr.mxu0 0.0
        %356 = vmatpush1.msra.mxu0 0.0
        %357 = vmatprep.subr.mxu0 0.0
        %358 = vmatpush1.msra.mxu0 0.0
        %359 = vmatprep.subr.mxu0 0.0
        %360 = vmatpush1.msra.mxu0 0.0
        %361 = vmatprep.subr.mxu0 0.0
        %362 = vmatpush1.msra.mxu0 0.0
        %363 = vmatprep.subr.mxu0 0.0
        %364 = vmatpush1.msra.mxu0 0.0
        %365 = vmatprep.subr.mxu0 0.0
        %366 = vmatpush1.msra.mxu0 0.0
        %367 = vmatprep.subr.mxu0 0.0
        %368 = vmatpush1.msra.mxu0 0.0
        %369 = vmatprep.mubr.f32.mxu0 0.0
        %370 = vmatmul.mubr.f32.gmra.mrb[0].mxu0 %v303
        %v371 = vpop.f32.mrb[0].mxu0
        %v372 = vadd.f32 0.0, %v371
        %v373 = vpop.f32.mrb[0].mxu0
        %374 = vdwg.mxu0
        %v375 = vmax.f32 %v372, 0.0
        %v376 = vld [vmem:[%s3] sm:$0x3]
        %vm377 = vcmask 15360
        %v379 = vsel %vm377, %v375, 0
        %vm381 = vcmask 1041408
        %v383 = vsel %vm381, %v376, 0
        %385 = vmatprep.subr.mxu0 0.0
        %386 = vmatpush1.msra.mxu0 %v383
        %387 = vmatprep.subr.mxu0 0.0
        %388 = vmatpush1.msra.mxu0 0.0
        %389 = vmatprep.subr.mxu0 0.0
        %390 = vmatpush1.msra.mxu0 0.0
        %391 = vmatprep.subr.mxu0 0.0
        %392 = vmatpush1.msra.mxu0 0.0
        %393 = vmatprep.subr.mxu0 0.0
        %394 = vmatpush1.msra.mxu0 0.0
        %395 = vmatprep.subr.mxu0 0.0
        %396 = vmatpush1.msra.mxu0 0.0
        %397 = vmatprep.subr.mxu0 0.0
        %398 = vmatpush1.msra.mxu0 0.0
        %399 = vmatprep.subr.mxu0 0.0
        %400 = vmatpush1.msra.mxu0 0.0
        %401 = vmatprep.subr.mxu0 0.0
        %402 = vmatpush1.msra.mxu0 0.0
        %403 = vmatprep.subr.mxu0 0.0
        %404 = vmatpush1.msra.mxu0 0.0
        %405 = vmatprep.subr.mxu0 0.0
        %406 = vmatpush1.msra.mxu0 0.0
        %407 = vmatprep.subr.mxu0 0.0
        %408 = vmatpush1.msra.mxu0 0.0
        %409 = vmatprep.subr.mxu0 0.0
        %410 = vmatpush1.msra.mxu0 0.0
        %411 = vmatprep.subr.mxu0 0.0
        %412 = vmatpush1.msra.mxu0 0.0
        %413 = vmatprep.subr.mxu0 0.0
        %414 = vmatpush1.msra.mxu0 0.0
        %415 = vmatprep.subr.mxu0 0.0
        %416 = vmatpush1.msra.mxu0 0.0
        %417 = vmatprep.subr.mxu0 0.0
        %418 = vmatpush1.msra.mxu0 0.0
        %419 = vmatprep.subr.mxu0 0.0
        %420 = vmatpush1.msra.mxu0 0.0
        %421 = vmatprep.subr.mxu0 0.0
        %422 = vmatpush1.msra.mxu0 0.0
        %423 = vmatprep.subr.mxu0 0.0
        %424 = vmatpush1.msra.mxu0 0.0
        %425 = vmatprep.subr.mxu0 0.0
        %426 = vmatpush1.msra.mxu0 0.0
        %427 = vmatprep.subr.mxu0 0.0
        %428 = vmatpush1.msra.mxu0 0.0
        %429 = vmatprep.subr.mxu0 0.0
        %430 = vmatpush1.msra.mxu0 0.0
        %431 = vmatprep.subr.mxu0 0.0
        %432 = vmatpush1.msra.mxu0 0.0
        %433 = vmatprep.subr.mxu0 0.0
        %434 = vmatpush1.msra.mxu0 0.0
        %435 = vmatprep.subr.mxu0 0.0
        %436 = vmatpush1.msra.mxu0 0.0
        %437 = vmatprep.subr.mxu0 0.0
        %438 = vmatpush1.msra.mxu0 0.0
        %439 = vmatprep.subr.mxu0 0.0
        %440 = vmatpush1.msra.mxu0 0.0
        %441 = vmatprep.subr.mxu0 0.0
        %442 = vmatpush1.msra.mxu0 0.0
        %443 = vmatprep.subr.mxu0 0.0
        %444 = vmatpush1.msra.mxu0 0.0
        %445 = vmatprep.subr.mxu0 0.0
        %446 = vmatpush1.msra.mxu0 0.0
        %447 = vmatprep.subr.mxu0 0.0
        %448 = vmatpush1.msra.mxu0 0.0
        %449 = vmatprep.mubr.f32.mxu0 0.0
        %450 = vmatmul.mubr.f32.gmra.mrb[0].mxu0 %v379
        %v451 = vpop.f32.mrb[0].mxu0
        %v452 = vadd.f32 0.0, %v451
        %v453 = vpop.f32.mrb[0].mxu0
        %454 = vdwg.mxu0
        %v455 = vxor.u32 %v452, 2147483648
        %v456 = vmul.f32 %v455, 1.442695
        %v457 = vpow.pop %v456
        %v458 = vadd.f32 %v457, 1.0
        %v459 = vrcp.pop %v458
        %v460 = vmul.f32 1.0, %v459
        %v461 = vmul.f32 %v460, %v298
        %v462 = vxor.u32 %v461, 2147483648
        %v463 = vmul.f32 %v462, 1.442695
        %v464 = vpow.pop %v463
        %v465 = vadd.f32 %v464, 1.0
        %v466 = vrcp.pop %v465
        %v467 = vmul.f32 1.0, %v466
        %v468 = vlaneseq
        %v469 = vshrl.u32 %v468, 7
        %v470 = vsub.s32 0, %v469
        %v471 = vrot.slane %v467, %v470
        %473 = vbcast.lane.b32.xlu0 %v471, 256
        %v474 = vpop.permute.xlu0 %473
        %v475 = vmul.f32 %v214, %v474
        %v476 = vmul.f32 %v215, %v474
        %477 = vst [vmem:[%s213] sm:$0xff] %v475
        %478 = vst [vmem:[%s213 + $0x8] sm:$0xff] %v476
        %s479 = sand.u32 %s118, 1
        %s480 = scalar_lea.sflag [#allocation4], %s479
        %s481 = sand.u32 %s118, 1
        %s482 = smul.addr %s481, 16
        %s483 = scalar_lea.vmem [#allocation5], %s482
        // Predicated region
        $region41: #{tpu_custom_call.1} parent=35 // pred_check
          %p484 = pneg %p128
        $region42: #{tpu_custom_call.1} parent=35 // pred_check_branch
          %486 = sbr.rel (%p484) target = $region44
        $region43: #{tpu_custom_call.1} parent=35 // pred_region
          %s488 = ssub.s32 256, 256
          %489 = vsyncadd %s480, %s488
          %s490 = smul.addr %s21, 2
          %s491 = smul.addr %s490, 128
          %s492 = scalar_lea.hbm %s4, %s491
          %s494 = sshll.u32 %s483, 4
          %s495 = int_to_ptr.vmem [resolvable:$true] %s494
          %497 = dma.vmem_to_hbm [thread:$0]  %s495, 256, %s492, %s480
        $region44: #{tpu_custom_call.1} parent=35 // pred_fallthru
          _
      $region36: #{tpu_custom_call.1} parent=5 // pred_fallthru
        _
      %p498 = scmp.le.s32.totalorder 2, %s16
      // Predicated region
      $region45: #{tpu_custom_call.1} parent=5 // pred_check
        %p499 = pneg %p498
      $region46: #{tpu_custom_call.1} parent=5 // pred_check_branch
        %501 = sbr.rel (%p499) target = $region48
      $region47: #{tpu_custom_call.1} parent=5 // pred_region
        %s502 = ssub.s32 %s16, 2
        // Predicated region
        $region49: #{tpu_custom_call.1} parent=47 // pred_check
          %p503 = pneg %p134
        $region50: #{tpu_custom_call.1} parent=47 // pred_check_branch
          %505 = sbr.rel (%p503) target = $region52
        $region51: #{tpu_custom_call.1} parent=47 // pred_region
          %s506 = sand.u32 %s119, 1
          %s507 = scalar_lea.sflag [#allocation4], %s506
          %s508 = sand.u32 %s119, 1
          %s509 = smul.addr %s508, 16
          %s510 = scalar_lea.vmem [#allocation5], %s509
          %511 = dma.done %s507, 256
        $region52: #{tpu_custom_call.1} parent=47 // pred_fallthru
          _
      $region48: #{tpu_custom_call.1} parent=5 // pred_fallthru
        _
    $region6: #{tpu_custom_call.1} parent=1 // loop_footer
      %s20 = sadd.s32 1, %s16
    $region7: #{tpu_custom_call.1} parent=1 // loop_footer_branch
      %15 = sbr.rel target = $region3
    $region8: #{tpu_custom_call.1} parent=1 // loop_exit
      _
    %512 = vsyncpa [#allocation3], 1
    %s513 = scalar_lea.sflag [#allocation3], 1
    %514 = vsyncpa %s513, 1
    %515 = vsyncpa [#allocation4], 1
    %s516 = scalar_lea.sflag [#allocation4], 1
    %517 = vsyncpa %s516, 1

</llo_original>
